<compile_context>
chip_gen: v5e
topology: v5e:2x2
jax: 0.10.0
libtpu: 0.0.40
codegen_flags: <defaults>
</compile_context>

<pallas_src>
import jax
import jax.numpy as jnp
from jax.experimental import pallas as pl
from jax.experimental.pallas import tpu as pltpu


_LANE_TARGET = 1024                 # preferred lane-dense last dim (multiple of 128)
_DEFAULT_TILE_BYTES = 3 * 1024 * 1024


def _device_tile_budget():
    """Per-buffer VMEM tile budget (bytes) and optional scoped-VMEM override."""
    try:
        kind = jax.devices()[0].device_kind.lower()
    except Exception:  # pragma: no cover - be robust on exotic runtimes
        return _DEFAULT_TILE_BYTES, None
    if "v6" in kind:
        # v6e: 128 MiB physical VMEM; 2x2x8 MiB buffers need the scoped limit raised.
        return 8 * 1024 * 1024, 48 * 1024 * 1024
    if "v7" in kind or "7x" in kind:
        # v7x: 64 MiB physical, 32 MiB scoped default; 2x2x6 = 24 MiB fits as-is.
        return 6 * 1024 * 1024, None
    # v5e and unknown: 16 MiB scoped default -> 2x2x3 = 12 MiB is safe.
    return _DEFAULT_TILE_BYTES, None


# ---------------------------------------------------------------------------
# Kernel: pass-through copy (the pipelined-copy template for NAS subclasses).
# ---------------------------------------------------------------------------
def _copy_kernel(x_ref, o_ref):
    o_ref[...] = x_ref[...]


def nas_device_copy(x: jax.Array) -> jax.Array:
    """Lane-dense, pad-free, double-buffered VMEM copy of `x` (identity)."""
    total = int(x.size)
    if total == 0:
        return x

    itemsize = jnp.dtype(x.dtype).itemsize
    granule = {4: 8, 2: 16, 1: 32}.get(itemsize, 8)  # dtype-aware sublane granule
    tile_bytes, vmem_limit = _device_tile_budget()

    cp_kwargs = dict(dimension_semantics=("parallel",))
    if vmem_limit is not None:
        cp_kwargs["vmem_limit_bytes"] = vmem_limit
    compiler_params = pltpu.CompilerParams(**cp_kwargs)

    # Largest multiple-of-128 divisor of `total` (<= _LANE_TARGET) -> lane dim.
    lane = 0
    for cand in range(_LANE_TARGET, 0, -128):
        if total % cand == 0:
            lane = cand
            break

    if lane:
        # --- aligned path: reshape to (rows, lane), no padding, no slicing ---
        rows = total // lane
        x2d = x.reshape(rows, lane)

        tile_rows = tile_bytes // (lane * itemsize)
        tile_rows = max(granule, (tile_rows // granule) * granule)

        if rows <= tile_rows or rows < granule:
            # Single full-array block: block_shape == array dims is exempt from
            # the (8,128) rule; no per-step grid overhead.
            tile_rows = rows
            grid = (1,)
        else:
            # Ragged final block is masked by Pallas (no wrapper-side pad/slice).
            grid = (pl.cdiv(rows, tile_rows),)

        processed_rows = grid[0] * tile_rows
        out2d = pl.pallas_call(
            _copy_kernel,
            out_shape=jax.ShapeDtypeStruct((rows, lane), x.dtype),
            grid=grid,
            in_specs=[pl.BlockSpec((tile_rows, lane), lambda i: (i, 0))],
            out_specs=pl.BlockSpec((tile_rows, lane), lambda i: (i, 0)),
            compiler_params=compiler_params,
            cost_estimate=pl.CostEstimate(
                flops=0, transcendentals=0,
                bytes_accessed=2 * processed_rows * lane * itemsize),
        )(x2d)
        return out2d.reshape(x.shape)

    # --- fallback path: element count has no multiple-of-128 divisor ---------
    flat = x.reshape(total)
    if total * itemsize <= tile_bytes:
        # Single full-array 1-D block (block_shape == array dim -> exempt).
        out = pl.pallas_call(
            _copy_kernel,
            out_shape=jax.ShapeDtypeStruct((total,), x.dtype),
            grid=(1,),
            in_specs=[pl.BlockSpec((total,), lambda i: (0,))],
            out_specs=pl.BlockSpec((total,), lambda i: (0,)),
            compiler_params=compiler_params,
            cost_estimate=pl.CostEstimate(
                flops=0, transcendentals=0,
                bytes_accessed=2 * total * itemsize),
        )(flat)
        return out.reshape(x.shape)

    # Large and unaligned: 1-D tiles (multiple of 1024 lanes), ragged tail masked.
    tile_len = max(_LANE_TARGET,
                   (tile_bytes // itemsize) // _LANE_TARGET * _LANE_TARGET)
    grid = (pl.cdiv(total, tile_len),)
    out = pl.pallas_call(
        _copy_kernel,
        out_shape=jax.ShapeDtypeStruct((total,), x.dtype),
        grid=grid,
        in_specs=[pl.BlockSpec((tile_len,), lambda i: (i,))],
        out_specs=pl.BlockSpec((tile_len,), lambda i: (i,)),
        compiler_params=compiler_params,
        cost_estimate=pl.CostEstimate(
            flops=0, transcendentals=0,
            bytes_accessed=2 * grid[0] * tile_len * itemsize),
    )(flat)
    return out.reshape(x.shape)


# ---------------------------------------------------------------------------
# JAX/Pallas mirror of the PyTorch NAS_Module base class.
# ---------------------------------------------------------------------------
class NAS_Module:
    def __init__(self):
        self._weights = []   # base class holds no parameters
        self._t = 1.0        # temperature, starts at 1 (plain Python scalar)

    def sub_t(self, sub: float):
        # Host-side scalar schedule, exactly like the PyTorch original.
        self._t = max(1e-05, self._t - sub)

    def forward(self, x: jax.Array, *, device_copy: bool = False) -> jax.Array:
        # TODO(synk): NAS_Module.forward raises NotImplementedError in the
        # PyTorch spec (abstract). Base-class semantics are identity: the fast
        # path returns `x` with no device work; `device_copy=True` exercises
        # the Pallas pipelined-copy template that concrete subclasses reuse.
        if device_copy:
            return nas_device_copy(x)
        return x

    def getKeras(self, x):
        # TODO(synk): Keras export is host-side framework code, no TPU kernel.
        raise NotImplementedError("getKeras is not implemented")

    def __call__(self, x, **kw):
        return self.forward(x, **kw)


if __name__ == "__main__":
    key = jax.random.PRNGKey(0)
    # Small NCHW input consistent with a conv-style NAS search space.
    x = jax.random.normal(key, (2, 4, 16, 16), dtype=jnp.float32)

    mod = NAS_Module()

    # Fast path: identity forward, no kernel launch, no HBM traffic.
    y = jax.block_until_ready(mod(x))
    assert y.shape == x.shape and y.dtype == x.dtype
    assert bool(jnp.array_equal(y, x))

    # Pallas copy template (aligned path: 2048 elems -> (2, 1024) single block).
    y_dev = jax.block_until_ready(mod(x, device_copy=True))
    assert y_dev.shape == x.shape and y_dev.dtype == x.dtype
    assert bool(jnp.array_equal(y_dev, x))

    # Unaligned-size input exercises the pad-free fallback path (105 elems).
    x_odd = jax.random.normal(jax.random.PRNGKey(1), (3, 5, 7), dtype=jnp.float32)
    y_odd = jax.block_until_ready(nas_device_copy(x_odd))
    assert bool(jnp.array_equal(y_odd, x_odd))

    # Temperature schedule: t = max(1e-5, t - sub)  (host-side, no kernel)
    mod.sub_t(0.3)
    mod.sub_t(0.3)
    mod.sub_t(0.5)  # would go negative -> clamps to 1e-5
    assert abs(mod._t - 1e-05) < 1e-12

    print("KERNEL_OK")
</pallas_src>

<mosaic_0001>
module attributes {stable_mosaic.version = 11 : i64} {
  func.func @_copy_kernel(%arg0: i32, %arg1: memref<2x1024xf32, #tpu.memory_space<vmem>>, %arg2: memref<2x1024xf32, #tpu.memory_space<vmem>>) attributes {dimension_semantics = [#tpu.dimension_semantics<parallel>], iteration_bounds = array<i64: 1>, scalar_prefetch = 0 : i64, scratch_operands = 0 : i64, tpu.core_type = #tpu.core_type<tc>, window_params = [{transform_indices = @transform_0, window_bounds = array<i64: 2, 1024>}, {transform_indices = @transform_1, window_bounds = array<i64: 2, 1024>}]} {
    %c0 = arith.constant 0 : index
    %c0_0 = arith.constant 0 : index
    %0 = vector.load %arg1[%c0, %c0_0] : memref<2x1024xf32, #tpu.memory_space<vmem>>, vector<2x1024xf32>
    %c0_1 = arith.constant 0 : index
    %c0_2 = arith.constant 0 : index
    %1 = vector.load %arg2[%c0_1, %c0_2] : memref<2x1024xf32, #tpu.memory_space<vmem>>, vector<2x1024xf32>
    tpu.vector_store %arg2[%c0_1, %c0_2], %0 {strides = array<i32>} : memref<2x1024xf32, #tpu.memory_space<vmem>>, vector<2x1024xf32>,
    return
  }
  func.func @transform_0(%arg0: i32) -> (i32, i32) {
    %c0_i32 = arith.constant 0 : i32
    %c0_i32_0 = arith.constant 0 : i32
    return %arg0, %c0_i32 : i32, i32
  }
  func.func @transform_1(%arg0: i32) -> (i32, i32) {
    %c0_i32 = arith.constant 0 : i32
    %c0_i32_0 = arith.constant 0 : i32
    return %arg0, %c0_i32 : i32, i32
  }
}

</mosaic_0001>

<llo_original>
// kernel: tpu_custom_call.1
$region0: #{tpu_custom_call.1}
  #allocation0 [shape = 'u32[]', space=smem, size = 0x4, offset = 0x4, fixed_abs, tag = 'smem constant byte address 0x4 - core index']
  #allocation1 [shape = 'u32[72,128]{1,0:T(1,128)}', space=vmem, size = 0x9000, scoped, tag = 'internal scratch']
  %s0 = inlined_call_operand.hbm [shape: f32[2,1024], index: 0, kind: input, shape index: {}]
  %s1 = inlined_call_operand.hbm [shape: f32[2,1024], index: 1, kind: output, shape index: {}]
  %s2 = sld [smem:[#allocation0]]
  $region18: #{tpu_custom_call.1} parent=0
    _
  %s4 = ssub.s32 1, %s2
  %s5 = scalar_select 0, %s4, %s2
  $region1: #{tpu_custom_call.1} parent=0
    #allocation2 [shape = 'u8[8192]{0}', space=vmem, size = 0x2000, scoped, tag = 'input window, operand 0, single buffered']
    #allocation3 [shape = 's32[1]{0}', space=sflag, size = 0x4, scoped, tag = 'scoped memory for tpu_custom_call.1']
    #allocation4 [shape = 's32[1]{0}', space=sflag, size = 0x4, scoped, tag = 'scoped memory for tpu_custom_call.1']
    #allocation5 [shape = 'u8[8192]{0}', space=vmem, size = 0x2000, scoped, tag = 'output window, operand 0, single buffered']
    %6 = vsyncpa [#allocation3], 0
    %7 = vsyncpa [#allocation4], 0
    // Predicated region
    $region2: #{tpu_custom_call.1} parent=1 // pred_check
      _
    $region3: #{tpu_custom_call.1} parent=1 // pred_check_branch
      %9 = sbr.rel (0) target = $region5
    $region4: #{tpu_custom_call.1} parent=1 // pred_region
      %11 = vsyncadd [#allocation3], 0
      %s13 = sshll.u32 %s0, 4
      %s14 = int_to_ptr.hbm [resolvable:$true] %s13
      %s15 = sshll.u32 [#allocation2], 4
      %s16 = int_to_ptr.vmem [resolvable:$true] %s15
      %18 = dma.hbm_to_vmem [thread:$0]  %s14, 256, %s16, [#allocation3]
    $region5: #{tpu_custom_call.1} parent=1 // pred_fallthru
      _
    // Predicated region
    $region6: #{tpu_custom_call.1} parent=1 // pred_check
      _
    $region7: #{tpu_custom_call.1} parent=1 // pred_check_branch
      %20 = sbr.rel (0) target = $region9
    $region8: #{tpu_custom_call.1} parent=1 // pred_region
      %22 = dma.done [#allocation3], 256
    $region9: #{tpu_custom_call.1} parent=1 // pred_fallthru
      _
    %v23 = vld [vmem:[#allocation2] sm:$0xff]
    %v24 = vld [vmem:[#allocation2 + $0x8] sm:$0xff]
    %25 = vst [vmem:[#allocation5] sm:$0xff] %v23
    %26 = vst [vmem:[#allocation5 + $0x8] sm:$0xff] %v24
    // Predicated region
    $region10: #{tpu_custom_call.1} parent=1 // pred_check
      _
    $region11: #{tpu_custom_call.1} parent=1 // pred_check_branch
      %28 = sbr.rel (0) target = $region13
    $region12: #{tpu_custom_call.1} parent=1 // pred_region
      %30 = vsyncadd [#allocation4], 0
      %s32 = sshll.u32 [#allocation5], 4
      %s33 = int_to_ptr.vmem [resolvable:$true] %s32
      %s34 = sshll.u32 %s1, 4
      %s35 = int_to_ptr.hbm [resolvable:$true] %s34
      %37 = dma.vmem_to_hbm [thread:$0]  %s33, 256, %s35, [#allocation4]
    $region13: #{tpu_custom_call.1} parent=1 // pred_fallthru
      _
    // Predicated region
    $region14: #{tpu_custom_call.1} parent=1 // pred_check
      _
    $region15: #{tpu_custom_call.1} parent=1 // pred_check_branch
      %39 = sbr.rel (0) target = $region17
    $region16: #{tpu_custom_call.1} parent=1 // pred_region
      %41 = dma.done [#allocation4], 256
    $region17: #{tpu_custom_call.1} parent=1 // pred_fallthru
      _
    %42 = vsyncpa [#allocation3], 1
    %43 = vsyncpa [#allocation4], 1

</llo_original>
